<compile_context>
chip_gen: v6e
topology: v6e:2x2x1
jax: 0.10.0
libtpu: 0.0.40
codegen_flags: <defaults>
</compile_context>

<pallas_src>
import functools

import jax
import jax.numpy as jnp
from jax.experimental import pallas as pl
from jax.experimental.pallas import tpu as pltpu

_NEG_LARGE = -1e30  # bias for padded class columns: never the max, exp() underflows to 0


def _round_up(x: int, m: int) -> int:
    return (x + m - 1) // m * m


def _epilogue(logits, sens, out_ref, theta, l_values, c_pad):
    """Softmax-free argmax + critical-region test + ROC override; lane-dense store."""
    lt = jnp.transpose(logits)                                    # (C_pad, TILE_B)

    m = jnp.max(lt, axis=0, keepdims=True)                        # (1, TILE_B)
    denom = jnp.sum(jnp.exp(lt - m), axis=0, keepdims=True)       # (1, TILE_B)
    max_prob = jnp.float32(1.0) / denom                           # == max(softmax(logits))
    critical = max_prob <= jnp.float32(theta)

    # First-max index (matches torch.argmax tie-breaking), computed on logits.
    cls = jax.lax.broadcasted_iota(jnp.int32, lt.shape, 0).astype(jnp.float32)
    preds = jnp.min(
        jnp.where(lt == m, cls, jnp.float32(c_pad)),
        axis=0, keepdims=True,
    ).astype(jnp.int32)                                           # (1, TILE_B)

    # ROC override per protected group (L_values is a static Python dict).
    for prot_value, forced_label in l_values.items():
        mask = (sens == jnp.int32(prot_value)) & critical
        preds = jnp.where(mask, jnp.int32(forced_label), preds)

    out_ref[...] = preds                                          # lane-dense int32 store


def _roc_kernel_single(x_ref, w_ref, b_ref, sens_ref, out_ref, *,
                       theta, l_values, c_pad):
    """Whole contraction in one MXU call: no K axis, no accumulator scratch."""
    logits = jnp.dot(x_ref[...], w_ref[...],
                     preferred_element_type=jnp.float32) + b_ref[...]
    _epilogue(logits, sens_ref[...], out_ref, theta, l_values, c_pad)


def _roc_kernel_multi(x_ref, w_ref, b_ref, sens_ref, out_ref, acc_ref, *,
                      theta, l_values, c_pad):
    """K-tiled bf16 matmul with f32 VMEM accumulator + fused epilogue on the last K step."""
    k = pl.program_id(1)

    @pl.when(k == 0)
    def _init():
        acc_ref[...] = jnp.zeros_like(acc_ref)

    acc_ref[...] += jnp.dot(x_ref[...], w_ref[...],
                            preferred_element_type=jnp.float32)

    @pl.when(k == pl.num_programs(1) - 1)
    def _finalize():
        _epilogue(acc_ref[...] + b_ref[...], sens_ref[...], out_ref,
                  theta, l_values, c_pad)


def roc_model_wrapper_forward(x, sensitive_features, W, b, theta, L_values,
                              *, max_tile_b=1024, max_tile_k=2048):
    """JAX wrapper: flattens NCHW input, pads to 128-multiples, calls the fused kernel.

    Returns int32 predictions of shape (B,).
    """
    B = x.shape[0]
    x2d = x.reshape(B, -1)                       # (B, D) row-major flatten
    D, num_classes = W.shape

    c_pad = _round_up(num_classes, 128)
    d_pad = _round_up(D, 128)
    b_rows = _round_up(B, 128)

    # --- batch tiling: divisor of b_rows; >= 2 tiles when possible (v7x megacore) ---
    if b_rows >= 256:
        divs = [t for t in range(128, min(max_tile_b, b_rows) + 1, 128)
                if b_rows % t == 0 and b_rows // t >= 2]
        tile_b = max(divs) if divs else 128
    else:
        tile_b = b_rows
    n_b = b_rows // tile_b

    # --- K tiling: single step when it fits, else largest 128-multiple divisor ---
    if d_pad <= max_tile_k:
        tile_k = d_pad
    else:
        tile_k = max(t for t in range(128, max_tile_k + 1, 128) if d_pad % t == 0)
    n_k = d_pad // tile_k

    # Stream x and W as bf16 (cast fuses with the padding pass); f32 accumulate in-kernel.
    x_bf = x2d.astype(jnp.bfloat16)
    if (b_rows, d_pad) != (B, D):
        x_bf = jnp.pad(x_bf, ((0, b_rows - B), (0, d_pad - D)))

    w_bf = W.astype(jnp.bfloat16)
    if (d_pad, c_pad) != (D, num_classes):
        w_bf = jnp.pad(w_bf, ((0, d_pad - D), (0, c_pad - num_classes)))

    bias = jnp.pad(
        b.reshape(1, num_classes).astype(jnp.float32),
        ((0, 0), (0, c_pad - num_classes)),
        constant_values=_NEG_LARGE,
    )

    sens = sensitive_features.reshape(B).astype(jnp.int32)
    if b_rows != B:
        # Padded rows use -1 (not a protected-group key); they are sliced off below anyway.
        sens = jnp.pad(sens, (0, b_rows - B), constant_values=-1)
    sens2d = sens.reshape(1, b_rows)             # batch on the lane axis

    common = dict(theta=float(theta), l_values=dict(L_values), c_pad=int(c_pad))

    if n_k == 1:
        kernel = functools.partial(_roc_kernel_single, **common)
        grid = (n_b,)
        in_specs = [
            pl.BlockSpec((tile_b, d_pad), lambda i: (i, 0)),      # x tile (bf16)
            pl.BlockSpec((d_pad, c_pad), lambda i: (0, 0)),       # W resident (bf16)
            pl.BlockSpec((1, c_pad), lambda i: (0, 0)),           # bias (f32, resident)
            pl.BlockSpec((1, tile_b), lambda i: (0, i)),          # sensitive features
        ]
        out_spec = pl.BlockSpec((1, tile_b), lambda i: (0, i))
        scratch = []
        dims = ("parallel",)
    else:
        kernel = functools.partial(_roc_kernel_multi, **common)
        grid = (n_b, n_k)
        in_specs = [
            pl.BlockSpec((tile_b, tile_k), lambda i, k: (i, k)),  # x tile (bf16)
            pl.BlockSpec((tile_k, c_pad), lambda i, k: (k, 0)),   # W tile (bf16)
            pl.BlockSpec((1, c_pad), lambda i, k: (0, 0)),        # bias (f32, resident)
            pl.BlockSpec((1, tile_b), lambda i, k: (0, i)),       # sensitive features
        ]
        out_spec = pl.BlockSpec((1, tile_b), lambda i, k: (0, i))
        scratch = [pltpu.VMEM((tile_b, c_pad), jnp.float32)]
        dims = ("parallel", "arbitrary")

    out = pl.pallas_call(
        kernel,
        out_shape=jax.ShapeDtypeStruct((1, b_rows), jnp.int32),
        grid_spec=pltpu.PrefetchScalarGridSpec(
            num_scalar_prefetch=0,
            grid=grid,
            in_specs=in_specs,
            out_specs=out_spec,
            scratch_shapes=scratch,
        ),
        compiler_params=pltpu.CompilerParams(dimension_semantics=dims),
    )(x_bf, w_bf, bias, sens2d)

    return out.reshape(b_rows)[:B]


def _reference(x, sens, W, b, theta, L_values):
    """Pure-JAX reference mirroring the PyTorch module semantics (bf16 base-model matmul)."""
    B = x.shape[0]
    logits = jnp.dot(
        x.reshape(B, -1).astype(jnp.bfloat16),
        W.astype(jnp.bfloat16),
        preferred_element_type=jnp.float32,
    ) + b.reshape(1, -1).astype(jnp.float32)
    probs = jax.nn.softmax(logits, axis=1)
    critical = jnp.max(probs, axis=1) <= theta
    preds = jnp.argmax(probs, axis=1).astype(jnp.int32)
    for prot_value, L in L_values.items():
        mask = (sens == prot_value) & critical
        preds = jnp.where(mask, jnp.int32(L), preds)
    return preds


if __name__ == "__main__":
    key = jax.random.PRNGKey(0)

    THETA = 0.30
    L_VALUES = {0: 3, 1: 5}              # protected-group value -> forced label

    # --- Test 1: single-K / single-batch-tile fast path (B=8, NCHW 4x16x16 -> D=1024) ---
    kx, kw, kb, ks = jax.random.split(key, 4)
    B, C, H, Wsp = 8, 4, 16, 16
    D = C * H * Wsp
    NUM_CLASSES = 8

    x = jax.random.normal(kx, (B, C, H, Wsp), dtype=jnp.float32)
    W_param = 0.02 * jax.random.normal(kw, (D, NUM_CLASSES), dtype=jnp.float32)
    b_param = 0.01 * jax.random.normal(kb, (NUM_CLASSES,), dtype=jnp.float32)
    sensitive = jax.random.randint(ks, (B,), 0, 2, dtype=jnp.int32)

    preds = roc_model_wrapper_forward(x, sensitive, W_param, b_param, THETA, L_VALUES)
    preds = jax.block_until_ready(preds)
    ref = _reference(x, sensitive, W_param, b_param, THETA, L_VALUES)
    assert preds.shape == (B,) and preds.dtype == jnp.int32
    assert bool(jnp.all(preds == ref)), (preds, ref)

    # --- Test 2: multi-K / multi-batch-tile path (ragged B=200, forced tile_k=128) ---
    kx2, kw2, kb2, ks2 = jax.random.split(jax.random.PRNGKey(0), 4)
    B2, C2, H2, W2 = 200, 4, 8, 8        # D2 = 256 -> 2 K tiles with max_tile_k=128
    D2 = C2 * H2 * W2
    NC2 = 5

    x2 = jax.random.normal(kx2, (B2, C2, H2, W2), dtype=jnp.float32)
    W2p = 0.05 * jax.random.normal(kw2, (D2, NC2), dtype=jnp.float32)
    b2p = 0.01 * jax.random.normal(kb2, (NC2,), dtype=jnp.float32)
    sens2 = jax.random.randint(ks2, (B2,), 0, 2, dtype=jnp.int32)

    preds2 = roc_model_wrapper_forward(x2, sens2, W2p, b2p, THETA, L_VALUES,
                                       max_tile_k=128)
    preds2 = jax.block_until_ready(preds2)
    ref2 = _reference(x2, sens2, W2p, b2p, THETA, L_VALUES)
    assert preds2.shape == (B2,) and preds2.dtype == jnp.int32
    assert bool(jnp.all(preds2 == ref2)), (preds2, ref2)

    print("KERNEL_OK")
</pallas_src>

<mosaic_0001>
module attributes {stable_mosaic.version = 11 : i64} {
  func.func @_roc_kernel_single(%arg0: i32, %arg1: memref<128x1024xbf16, #tpu.memory_space<vmem>>, %arg2: memref<1024x128xbf16, #tpu.memory_space<vmem>>, %arg3: memref<1x128xf32, #tpu.memory_space<vmem>>, %arg4: memref<1x128xi32, #tpu.memory_space<vmem>>, %arg5: memref<1x128xi32, #tpu.memory_space<vmem>>) attributes {dimension_semantics = [#tpu.dimension_semantics<parallel>], iteration_bounds = array<i64: 1>, scalar_prefetch = 0 : i64, scratch_operands = 0 : i64, tpu.core_type = #tpu.core_type<tc>, window_params = [{transform_indices = @transform_0, window_bounds = array<i64: 128, 1024>}, {pipeline_mode = #tpu.pipeline_mode<synchronous>, transform_indices = @transform_1, window_bounds = array<i64: 1024, 128>}, {pipeline_mode = #tpu.pipeline_mode<synchronous>, transform_indices = @transform_2, window_bounds = array<i64: 1, 128>}, {transform_indices = @transform_3, window_bounds = array<i64: 1, 128>}, {transform_indices = @transform_4, window_bounds = array<i64: 1, 128>}]} {
    %c0 = arith.constant 0 : index
    %c0_0 = arith.constant 0 : index
    %0 = vector.load %arg1[%c0, %c0_0] : memref<128x1024xbf16, #tpu.memory_space<vmem>>, vector<128x1024xbf16>
    %c0_1 = arith.constant 0 : index
    %c0_2 = arith.constant 0 : index
    %1 = vector.load %arg2[%c0_1, %c0_2] : memref<1024x128xbf16, #tpu.memory_space<vmem>>, vector<1024x128xbf16>
    %cst = arith.constant dense<0.000000e+00> : vector<128x128xf32>
    %2 = tpu.matmul %0, %1, %cst {dimension_numbers = #tpu.dot_dimension_numbers<[1], [0], [0], [1], [0, 0, 1, 1], [], []>} : vector<128x1024xbf16>, vector<1024x128xbf16>, vector<128x128xf32> -> vector<128x128xf32>
    %c0_3 = arith.constant 0 : index
    %c0_4 = arith.constant 0 : index
    %3 = vector.load %arg3[%c0_3, %c0_4] : memref<1x128xf32, #tpu.memory_space<vmem>>, vector<1x128xf32>
    %4 = vector.broadcast %3 : vector<1x128xf32> to vector<128x128xf32>
    %5 = arith.addf %2, %4 : vector<128x128xf32>
    %c0_5 = arith.constant 0 : index
    %c0_6 = arith.constant 0 : index
    %6 = vector.load %arg4[%c0_5, %c0_6] : memref<1x128xi32, #tpu.memory_space<vmem>>, vector<1x128xi32>
    %7 = tpu.transpose %5, [1, 0] : vector<128x128xf32> -> vector<128x128xf32>
    %cst_7 = arith.constant dense<0xFF800000> : vector<128xf32>
    %8 = vector.multi_reduction <maximumf>, %7, %cst_7 [0] : vector<128x128xf32> to vector<128xf32>
    %9 = vector.shape_cast %8 : vector<128xf32> to vector<1x128xf32>
    %10 = vector.broadcast %9 : vector<1x128xf32> to vector<128x128xf32>
    %11 = arith.subf %7, %10 : vector<128x128xf32>
    %12 = math.exp %11 : vector<128x128xf32>
    %cst_8 = arith.constant dense<0.000000e+00> : vector<128xf32>
    %13 = vector.multi_reduction <add>, %12, %cst_8 [0] : vector<128x128xf32> to vector<128xf32>
    %14 = vector.shape_cast %13 : vector<128xf32> to vector<1x128xf32>
    %cst_9 = arith.constant 1.000000e+00 : f32
    %15 = vector.broadcast %cst_9 : f32 to vector<1x128xf32>
    %16 = arith.divf %15, %14 : vector<1x128xf32>
    %cst_10 = arith.constant 3.000000e-01 : f32
    %17 = vector.broadcast %cst_10 : f32 to vector<1x128xf32>
    %18 = arith.cmpf ole, %16, %17 : vector<1x128xf32>
    %19 = tpu.iota {dimensions = array<i32: 0>} : vector<128x128xi32>
    %20 = arith.sitofp %19 : vector<128x128xi32> to vector<128x128xf32>
    %21 = vector.broadcast %9 : vector<1x128xf32> to vector<128x128xf32>
    %22 = arith.cmpf oeq, %7, %21 : vector<128x128xf32>
    %cst_11 = arith.constant 1.280000e+02 : f32
    %23 = vector.broadcast %cst_11 : f32 to vector<128x128xf32>
    %24 = arith.select %22, %20, %23 : vector<128x128xi1>, vector<128x128xf32>
    %cst_12 = arith.constant dense<0x7F800000> : vector<128xf32>
    %25 = vector.multi_reduction <minimumf>, %24, %cst_12 [0] : vector<128x128xf32> to vector<128xf32>
    %26 = vector.shape_cast %25 : vector<128xf32> to vector<1x128xf32>
    %27 = arith.fptosi %26 : vector<1x128xf32> to vector<1x128xi32>
    %c0_i32 = arith.constant 0 : i32
    %28 = vector.broadcast %c0_i32 : i32 to vector<1x128xi32>
    %29 = arith.cmpi eq, %6, %28 : vector<1x128xi32>
    %30 = arith.andi %29, %18 : vector<1x128xi1>
    %c3_i32 = arith.constant 3 : i32
    %31 = vector.broadcast %c3_i32 : i32 to vector<1x128xi32>
    %32 = arith.select %30, %31, %27 : vector<1x128xi1>, vector<1x128xi32>
    %c1_i32 = arith.constant 1 : i32
    %33 = vector.broadcast %c1_i32 : i32 to vector<1x128xi32>
    %34 = arith.cmpi eq, %6, %33 : vector<1x128xi32>
    %35 = arith.andi %34, %18 : vector<1x128xi1>
    %c5_i32 = arith.constant 5 : i32
    %36 = vector.broadcast %c5_i32 : i32 to vector<1x128xi32>
    %37 = arith.select %35, %36, %32 : vector<1x128xi1>, vector<1x128xi32>
    %c0_13 = arith.constant 0 : index
    %c0_14 = arith.constant 0 : index
    %38 = vector.load %arg5[%c0_13, %c0_14] : memref<1x128xi32, #tpu.memory_space<vmem>>, vector<1x128xi32>
    tpu.vector_store %arg5[%c0_13, %c0_14], %37 {strides = array<i32>} : memref<1x128xi32, #tpu.memory_space<vmem>>, vector<1x128xi32>,
    return
  }
  func.func @transform_0(%arg0: i32) -> (i32, i32) {
    %c0_i32 = arith.constant 0 : i32
    %c0_i32_0 = arith.constant 0 : i32
    return %arg0, %c0_i32 : i32, i32
  }
  func.func @transform_1(%arg0: i32) -> (i32, i32) {
    %c0_i32 = arith.constant 0 : i32
    %c0_i32_0 = arith.constant 0 : i32
    %c0_i32_1 = arith.constant 0 : i32
    return %c0_i32, %c0_i32_0 : i32, i32
  }
  func.func @transform_2(%arg0: i32) -> (i32, i32) {
    %c0_i32 = arith.constant 0 : i32
    %c0_i32_0 = arith.constant 0 : i32
    %c0_i32_1 = arith.constant 0 : i32
    return %c0_i32, %c0_i32_0 : i32, i32
  }
  func.func @transform_3(%arg0: i32) -> (i32, i32) {
    %c0_i32 = arith.constant 0 : i32
    %c0_i32_0 = arith.constant 0 : i32
    return %c0_i32, %arg0 : i32, i32
  }
  func.func @transform_4(%arg0: i32) -> (i32, i32) {
    %c0_i32 = arith.constant 0 : i32
    %c0_i32_0 = arith.constant 0 : i32
    return %c0_i32, %arg0 : i32, i32
  }
}

</mosaic_0001>

<llo_original>
// kernel: tpu_custom_call.1
$region0: #{tpu_custom_call.1}
  #allocation0 [shape = 'u32[]', space=smem, size = 0x4, offset = 0x4, fixed_abs, tag = 'smem constant byte address 0x4 - core index']
  #allocation1 [shape = 'u32[144,128]{1,0:T(1,128)}', space=vmem, size = 0x12000, scoped, tag = 'internal scratch']
  %s0 = inlined_call_operand.hbm [shape: bf16[128,1024], index: 0, kind: input, shape index: {}]
  %s1 = inlined_call_operand.hbm [shape: bf16[1024,128], index: 1, kind: input, shape index: {}]
  %s2 = inlined_call_operand.vmem [shape: f32[1,128], index: 2, kind: input, shape index: {}]
  %s3 = inlined_call_operand.vmem [shape: s32[1,128], index: 3, kind: input, shape index: {}]
  %s4 = inlined_call_operand.hbm [shape: s32[1,128], index: 4, kind: output, shape index: {}]
  %s5 = sld [smem:[#allocation0]]
  $region34: #{tpu_custom_call.1} parent=0
    _
  %s7 = ssub.s32 1, %s5
  %s8 = scalar_select 0, %s7, %s5
  $region1: #{tpu_custom_call.1} parent=0
    #allocation2 [shape = 'u8[262144]{0}', space=vmem, size = 0x40000, scoped, tag = 'input window, operand 0, single buffered']
    #allocation3 [shape = 's32[1]{0}', space=sflag, size = 0x4, scoped, tag = 'scoped memory for tpu_custom_call.1']
    #allocation4 [shape = 's32[1]{0}', space=sflag, size = 0x4, scoped, tag = 'scoped memory for tpu_custom_call.1']
    #allocation5 [shape = 'u8[262144]{0}', space=vmem, size = 0x40000, scoped, tag = 'input window, operand 1, single buffered']
    #allocation6 [shape = 's32[1]{0}', space=sflag, size = 0x4, scoped, tag = 'scoped memory for tpu_custom_call.1']
    #allocation7 [shape = 'u8[512]{0}', space=vmem, size = 0x400, scoped, tag = 'output window, operand 0, single buffered']
    %9 = vsyncpa [#allocation3], 0
    %10 = vsyncpa [#allocation6], 0
    %11 = vsyncpa [#allocation4], 0
    // Predicated region
    $region2: #{tpu_custom_call.1} parent=1 // pred_check
      _
    $region3: #{tpu_custom_call.1} parent=1 // pred_check_branch
      %13 = sbr.rel (0) target = $region5
    $region4: #{tpu_custom_call.1} parent=1 // pred_region
      %s15 = ssub.s32 8192, 8192
      %16 = vsyncadd [#allocation3], %s15
      %s17 = sshll.u32 [#allocation2], 4
      %s18 = int_to_ptr.vmem [resolvable:$true] %s17
      %23 = dma.hbm_to_vmem [thread:$0]  %s0, 8192, %s18, [#allocation3], 512, 512, 32
    $region5: #{tpu_custom_call.1} parent=1 // pred_fallthru
      _
    // Predicated region
    $region6: #{tpu_custom_call.1} parent=1 // pred_check
      _
    $region7: #{tpu_custom_call.1} parent=1 // pred_check_branch
      %25 = sbr.rel (0) target = $region9
    $region8: #{tpu_custom_call.1} parent=1 // pred_region
      %s27 = ssub.s32 8192, 8192
      %28 = vsyncadd [#allocation6], %s27
      %s29 = sshll.u32 [#allocation5], 4
      %s30 = int_to_ptr.vmem [resolvable:$true] %s29
      %35 = dma.hbm_to_vmem [thread:$0]  %s1, 8192, %s30, [#allocation6], 64, 64, 4
    $region9: #{tpu_custom_call.1} parent=1 // pred_fallthru
      _
    // Predicated region
    $region10: #{tpu_custom_call.1} parent=1 // pred_check
      _
    $region11: #{tpu_custom_call.1} parent=1 // pred_check_branch
      %37 = sbr.rel (0) target = $region13
    $region12: #{tpu_custom_call.1} parent=1 // pred_region
      _
    $region13: #{tpu_custom_call.1} parent=1 // pred_fallthru
      _
    // Predicated region
    $region14: #{tpu_custom_call.1} parent=1 // pred_check
      _
    $region15: #{tpu_custom_call.1} parent=1 // pred_check_branch
      %39 = sbr.rel (0) target = $region17
    $region16: #{tpu_custom_call.1} parent=1 // pred_region
      _
    $region17: #{tpu_custom_call.1} parent=1 // pred_fallthru
      _
    // Predicated region
    $region18: #{tpu_custom_call.1} parent=1 // pred_check
      _
    $region19: #{tpu_custom_call.1} parent=1 // pred_check_branch
      %41 = sbr.rel (0) target = $region21
    $region20: #{tpu_custom_call.1} parent=1 // pred_region
      %42 = dma.done [#allocation3], 8192
    $region21: #{tpu_custom_call.1} parent=1 // pred_fallthru
      _
    // Predicated region
    $region22: #{tpu_custom_call.1} parent=1 // pred_check
      _
    $region23: #{tpu_custom_call.1} parent=1 // pred_check_branch
      %44 = sbr.rel (0) target = $region25
    $region24: #{tpu_custom_call.1} parent=1 // pred_region
      %45 = dma.done [#allocation6], 8192
    $region25: #{tpu_custom_call.1} parent=1 // pred_fallthru
      _
    %v47 = vld [vmem:[#allocation2] sm:$0xff]
    %v48 = vld [vmem:[#allocation2 + $0x8] sm:$0xff]
    %v49 = vld [vmem:[#allocation2 + $0x10] sm:$0xff]
    %v50 = vld [vmem:[#allocation2 + $0x18] sm:$0xff]
    %v51 = vld [vmem:[#allocation2 + $0x20] sm:$0xff]
    %v52 = vld [vmem:[#allocation2 + $0x28] sm:$0xff]
    %v53 = vld [vmem:[#allocation2 + $0x30] sm:$0xff]
    %v54 = vld [vmem:[#allocation2 + $0x38] sm:$0xff]
    %v55 = vld [vmem:[#allocation2 + $0x40] sm:$0xff]
    %v56 = vld [vmem:[#allocation2 + $0x48] sm:$0xff]
    %v57 = vld [vmem:[#allocation2 + $0x50] sm:$0xff]
    %v58 = vld [vmem:[#allocation2 + $0x58] sm:$0xff]
    %v59 = vld [vmem:[#allocation2 + $0x60] sm:$0xff]
    %v60 = vld [vmem:[#allocation2 + $0x68] sm:$0xff]
    %v61 = vld [vmem:[#allocation2 + $0x70] sm:$0xff]
    %v62 = vld [vmem:[#allocation2 + $0x78] sm:$0xff]
    %v63 = vld [vmem:[#allocation2 + $0x80] sm:$0xff]
    %v64 = vld [vmem:[#allocation2 + $0x88] sm:$0xff]
    %v65 = vld [vmem:[#allocation2 + $0x90] sm:$0xff]
    %v66 = vld [vmem:[#allocation2 + $0x98] sm:$0xff]
    %v67 = vld [vmem:[#allocation2 + $0xa0] sm:$0xff]
    %v68 = vld [vmem:[#allocation2 + $0xa8] sm:$0xff]
    %v69 = vld [vmem:[#allocation2 + $0xb0] sm:$0xff]
    %v70 = vld [vmem:[#allocation2 + $0xb8] sm:$0xff]
    %v71 = vld [vmem:[#allocation2 + $0xc0] sm:$0xff]
    %v72 = vld [vmem:[#allocation2 + $0xc8] sm:$0xff]
    %v73 = vld [vmem:[#allocation2 + $0xd0] sm:$0xff]
    %v74 = vld [vmem:[#allocation2 + $0xd8] sm:$0xff]
    %v75 = vld [vmem:[#allocation2 + $0xe0] sm:$0xff]
    %v76 = vld [vmem:[#allocation2 + $0xe8] sm:$0xff]
    %v77 = vld [vmem:[#allocation2 + $0xf0] sm:$0xff]
    %v78 = vld [vmem:[#allocation2 + $0xf8] sm:$0xff]
    %v79 = vld [vmem:[#allocation2 + $0x100] sm:$0xff]
    %v80 = vld [vmem:[#allocation2 + $0x108] sm:$0xff]
    %v81 = vld [vmem:[#allocation2 + $0x110] sm:$0xff]
    %v82 = vld [vmem:[#allocation2 + $0x118] sm:$0xff]
    %v83 = vld [vmem:[#allocation2 + $0x120] sm:$0xff]
    %v84 = vld [vmem:[#allocation2 + $0x128] sm:$0xff]
    %v85 = vld [vmem:[#allocation2 + $0x130] sm:$0xff]
    %v86 = vld [vmem:[#allocation2 + $0x138] sm:$0xff]
    %v87 = vld [vmem:[#allocation2 + $0x140] sm:$0xff]
    %v88 = vld [vmem:[#allocation2 + $0x148] sm:$0xff]
    %v89 = vld [vmem:[#allocation2 + $0x150] sm:$0xff]
    %v90 = vld [vmem:[#allocation2 + $0x158] sm:$0xff]
    %v91 = vld [vmem:[#allocation2 + $0x160] sm:$0xff]
    %v92 = vld [vmem:[#allocation2 + $0x168] sm:$0xff]
    %v93 = vld [vmem:[#allocation2 + $0x170] sm:$0xff]
    %v94 = vld [vmem:[#allocation2 + $0x178] sm:$0xff]
    %v95 = vld [vmem:[#allocation2 + $0x180] sm:$0xff]
    %v96 = vld [vmem:[#allocation2 + $0x188] sm:$0xff]
    %v97 = vld [vmem:[#allocation2 + $0x190] sm:$0xff]
    %v98 = vld [vmem:[#allocation2 + $0x198] sm:$0xff]
    %v99 = vld [vmem:[#allocation2 + $0x1a0] sm:$0xff]
    %v100 = vld [vmem:[#allocation2 + $0x1a8] sm:$0xff]
    %v101 = vld [vmem:[#allocation2 + $0x1b0] sm:$0xff]
    %v102 = vld [vmem:[#allocation2 + $0x1b8] sm:$0xff]
    %v103 = vld [vmem:[#allocation2 + $0x1c0] sm:$0xff]
    %v104 = vld [vmem:[#allocation2 + $0x1c8] sm:$0xff]
    %v105 = vld [vmem:[#allocation2 + $0x1d0] sm:$0xff]
    %v106 = vld [vmem:[#allocation2 + $0x1d8] sm:$0xff]
    %v107 = vld [vmem:[#allocation2 + $0x1e0] sm:$0xff]
    %v108 = vld [vmem:[#allocation2 + $0x1e8] sm:$0xff]
    %v109 = vld [vmem:[#allocation2 + $0x1f0] sm:$0xff]
    %v110 = vld [vmem:[#allocation2 + $0x1f8] sm:$0xff]
    %v111 = vld [vmem:[#allocation5] sm:$0xf]
    %v112 = vld [vmem:[#allocation5 + $0x4] sm:$0xf]
    %v113 = vld [vmem:[#allocation5 + $0x8] sm:$0xf]
    %v114 = vld [vmem:[#allocation5 + $0xc] sm:$0xf]
    %v115 = vld [vmem:[#allocation5 + $0x10] sm:$0xf]
    %v116 = vld [vmem:[#allocation5 + $0x14] sm:$0xf]
    %v117 = vld [vmem:[#allocation5 + $0x18] sm:$0xf]
    %v118 = vld [vmem:[#allocation5 + $0x1c] sm:$0xf]
    %v119 = vld [vmem:[#allocation5 + $0x20] sm:$0xf]
    %v120 = vld [vmem:[#allocation5 + $0x24] sm:$0xf]
    %v121 = vld [vmem:[#allocation5 + $0x28] sm:$0xf]
    %v122 = vld [vmem:[#allocation5 + $0x2c] sm:$0xf]
    %v123 = vld [vmem:[#allocation5 + $0x30] sm:$0xf]
    %v124 = vld [vmem:[#allocation5 + $0x34] sm:$0xf]
    %v125 = vld [vmem:[#allocation5 + $0x38] sm:$0xf]
    %v126 = vld [vmem:[#allocation5 + $0x3c] sm:$0xf]
    %v127 = vld [vmem:[#allocation5 + $0x40] sm:$0xf]
    %v128 = vld [vmem:[#allocation5 + $0x44] sm:$0xf]
    %v129 = vld [vmem:[#allocation5 + $0x48] sm:$0xf]
    %v130 = vld [vmem:[#allocation5 + $0x4c] sm:$0xf]
    %v131 = vld [vmem:[#allocation5 + $0x50] sm:$0xf]
    %v132 = vld [vmem:[#allocation5 + $0x54] sm:$0xf]
    %v133 = vld [vmem:[#allocation5 + $0x58] sm:$0xf]
    %v134 = vld [vmem:[#allocation5 + $0x5c] sm:$0xf]
    %v135 = vld [vmem:[#allocation5 + $0x60] sm:$0xf]
    %v136 = vld [vmem:[#allocation5 + $0x64] sm:$0xf]
    %v137 = vld [vmem:[#allocation5 + $0x68] sm:$0xf]
    %v138 = vld [vmem:[#allocation5 + $0x6c] sm:$0xf]
    %v139 = vld [vmem:[#allocation5 + $0x70] sm:$0xf]
    %v140 = vld [vmem:[#allocation5 + $0x74] sm:$0xf]
    %v141 = vld [vmem:[#allocation5 + $0x78] sm:$0xf]
    %v142 = vld [vmem:[#allocation5 + $0x7c] sm:$0xf]
    %v143 = vld [vmem:[#allocation5 + $0x80] sm:$0xf]
    %v144 = vld [vmem:[#allocation5 + $0x84] sm:$0xf]
    %v145 = vld [vmem:[#allocation5 + $0x88] sm:$0xf]
    %v146 = vld [vmem:[#allocation5 + $0x8c] sm:$0xf]
    %v147 = vld [vmem:[#allocation5 + $0x90] sm:$0xf]
    %v148 = vld [vmem:[#allocation5 + $0x94] sm:$0xf]
    %v149 = vld [vmem:[#allocation5 + $0x98] sm:$0xf]
    %v150 = vld [vmem:[#allocation5 + $0x9c] sm:$0xf]
    %v151 = vld [vmem:[#allocation5 + $0xa0] sm:$0xf]
    %v152 = vld [vmem:[#allocation5 + $0xa4] sm:$0xf]
    %v153 = vld [vmem:[#allocation5 + $0xa8] sm:$0xf]
    %v154 = vld [vmem:[#allocation5 + $0xac] sm:$0xf]
    %v155 = vld [vmem:[#allocation5 + $0xb0] sm:$0xf]
    %v156 = vld [vmem:[#allocation5 + $0xb4] sm:$0xf]
    %v157 = vld [vmem:[#allocation5 + $0xb8] sm:$0xf]
    %v158 = vld [vmem:[#allocation5 + $0xbc] sm:$0xf]
    %v159 = vld [vmem:[#allocation5 + $0xc0] sm:$0xf]
    %v160 = vld [vmem:[#allocation5 + $0xc4] sm:$0xf]
    %v161 = vld [vmem:[#allocation5 + $0xc8] sm:$0xf]
    %v162 = vld [vmem:[#allocation5 + $0xcc] sm:$0xf]
    %v163 = vld [vmem:[#allocation5 + $0xd0] sm:$0xf]
    %v164 = vld [vmem:[#allocation5 + $0xd4] sm:$0xf]
    %v165 = vld [vmem:[#allocation5 + $0xd8] sm:$0xf]
    %v166 = vld [vmem:[#allocation5 + $0xdc] sm:$0xf]
    %v167 = vld [vmem:[#allocation5 + $0xe0] sm:$0xf]
    %v168 = vld [vmem:[#allocation5 + $0xe4] sm:$0xf]
    %v169 = vld [vmem:[#allocation5 + $0xe8] sm:$0xf]
    %v170 = vld [vmem:[#allocation5 + $0xec] sm:$0xf]
    %v171 = vld [vmem:[#allocation5 + $0xf0] sm:$0xf]
    %v172 = vld [vmem:[#allocation5 + $0xf4] sm:$0xf]
    %v173 = vld [vmem:[#allocation5 + $0xf8] sm:$0xf]
    %v174 = vld [vmem:[#allocation5 + $0xfc] sm:$0xf]
    %v175 = vld [vmem:[#allocation5 + $0x100] sm:$0xf]
    %v176 = vld [vmem:[#allocation5 + $0x104] sm:$0xf]
    %v177 = vld [vmem:[#allocation5 + $0x108] sm:$0xf]
    %v178 = vld [vmem:[#allocation5 + $0x10c] sm:$0xf]
    %v179 = vld [vmem:[#allocation5 + $0x110] sm:$0xf]
    %v180 = vld [vmem:[#allocation5 + $0x114] sm:$0xf]
    %v181 = vld [vmem:[#allocation5 + $0x118] sm:$0xf]
    %v182 = vld [vmem:[#allocation5 + $0x11c] sm:$0xf]
    %v183 = vld [vmem:[#allocation5 + $0x120] sm:$0xf]
    %v184 = vld [vmem:[#allocation5 + $0x124] sm:$0xf]
    %v185 = vld [vmem:[#allocation5 + $0x128] sm:$0xf]
    %v186 = vld [vmem:[#allocation5 + $0x12c] sm:$0xf]
    %v187 = vld [vmem:[#allocation5 + $0x130] sm:$0xf]
    %v188 = vld [vmem:[#allocation5 + $0x134] sm:$0xf]
    %v189 = vld [vmem:[#allocation5 + $0x138] sm:$0xf]
    %v190 = vld [vmem:[#allocation5 + $0x13c] sm:$0xf]
    %v191 = vld [vmem:[#allocation5 + $0x140] sm:$0xf]
    %v192 = vld [vmem:[#allocation5 + $0x144] sm:$0xf]
    %v193 = vld [vmem:[#allocation5 + $0x148] sm:$0xf]
    %v194 = vld [vmem:[#allocation5 + $0x14c] sm:$0xf]
    %v195 = vld [vmem:[#allocation5 + $0x150] sm:$0xf]
    %v196 = vld [vmem:[#allocation5 + $0x154] sm:$0xf]
    %v197 = vld [vmem:[#allocation5 + $0x158] sm:$0xf]
    %v198 = vld [vmem:[#allocation5 + $0x15c] sm:$0xf]
    %v199 = vld [vmem:[#allocation5 + $0x160] sm:$0xf]
    %v200 = vld [vmem:[#allocation5 + $0x164] sm:$0xf]
    %v201 = vld [vmem:[#allocation5 + $0x168] sm:$0xf]
    %v202 = vld [vmem:[#allocation5 + $0x16c] sm:$0xf]
    %v203 = vld [vmem:[#allocation5 + $0x170] sm:$0xf]
    %v204 = vld [vmem:[#allocation5 + $0x174] sm:$0xf]
    %v205 = vld [vmem:[#allocation5 + $0x178] sm:$0xf]
    %v206 = vld [vmem:[#allocation5 + $0x17c] sm:$0xf]
    %v207 = vld [vmem:[#allocation5 + $0x180] sm:$0xf]
    %v208 = vld [vmem:[#allocation5 + $0x184] sm:$0xf]
    %v209 = vld [vmem:[#allocation5 + $0x188] sm:$0xf]
    %v210 = vld [vmem:[#allocation5 + $0x18c] sm:$0xf]
    %v211 = vld [vmem:[#allocation5 + $0x190] sm:$0xf]
    %v212 = vld [vmem:[#allocation5 + $0x194] sm:$0xf]
    %v213 = vld [vmem:[#allocation5 + $0x198] sm:$0xf]
    %v214 = vld [vmem:[#allocation5 + $0x19c] sm:$0xf]
    %v215 = vld [vmem:[#allocation5 + $0x1a0] sm:$0xf]
    %v216 = vld [vmem:[#allocation5 + $0x1a4] sm:$0xf]
    %v217 = vld [vmem:[#allocation5 + $0x1a8] sm:$0xf]
    %v218 = vld [vmem:[#allocation5 + $0x1ac] sm:$0xf]
    %v219 = vld [vmem:[#allocation5 + $0x1b0] sm:$0xf]
    %v220 = vld [vmem:[#allocation5 + $0x1b4] sm:$0xf]
    %v221 = vld [vmem:[#allocation5 + $0x1b8] sm:$0xf]
    %v222 = vld [vmem:[#allocation5 + $0x1bc] sm:$0xf]
    %v223 = vld [vmem:[#allocation5 + $0x1c0] sm:$0xf]
    %v224 = vld [vmem:[#allocation5 + $0x1c4] sm:$0xf]
    %v225 = vld [vmem:[#allocation5 + $0x1c8] sm:$0xf]
    %v226 = vld [vmem:[#allocation5 + $0x1cc] sm:$0xf]
    %v227 = vld [vmem:[#allocation5 + $0x1d0] sm:$0xf]
    %v228 = vld [vmem:[#allocation5 + $0x1d4] sm:$0xf]
    %v229 = vld [vmem:[#allocation5 + $0x1d8] sm:$0xf]
    %v230 = vld [vmem:[#allocation5 + $0x1dc] sm:$0xf]
    %v231 = vld [vmem:[#allocation5 + $0x1e0] sm:$0xf]
    %v232 = vld [vmem:[#allocation5 + $0x1e4] sm:$0xf]
    %v233 = vld [vmem:[#allocation5 + $0x1e8] sm:$0xf]
    %v234 = vld [vmem:[#allocation5 + $0x1ec] sm:$0xf]
    %v235 = vld [vmem:[#allocation5 + $0x1f0] sm:$0xf]
    %v236 = vld [vmem:[#allocation5 + $0x1f4] sm:$0xf]
    %v237 = vld [vmem:[#allocation5 + $0x1f8] sm:$0xf]
    %v238 = vld [vmem:[#allocation5 + $0x1fc] sm:$0xf]
    %v239 = vld [vmem:[%s2] sm:$0x1]
    %v241 = vlaneseq
    %v242 = vshrl.u32 %v241, 7
    %v243 = vsub.s32 0, %v242
    %v244 = vrot.slane %v239, %v243
    %v310 = vunpack.c.l.b16 %v47
    %v311 = vunpack.c.h.b16 %v47
    %v312 = vunpack.c.l.b16 %v48
    %v313 = vunpack.c.h.b16 %v48
    %v314 = vunpack.c.l.b16 %v49
    %v315 = vunpack.c.h.b16 %v49
    %v316 = vunpack.c.l.b16 %v50
    %v317 = vunpack.c.h.b16 %v50
    %v318 = vunpack.c.l.b16 %v51
    %v319 = vunpack.c.h.b16 %v51
    %v320 = vunpack.c.l.b16 %v52
    %v321 = vunpack.c.h.b16 %v52
    %v322 = vunpack.c.l.b16 %v53
    %v323 = vunpack.c.h.b16 %v53
    %v324 = vunpack.c.l.b16 %v54
    %v325 = vunpack.c.h.b16 %v54
    %v326 = vunpack.c.l.b16 %v55
    %v327 = vunpack.c.h.b16 %v55
    %v328 = vunpack.c.l.b16 %v56
    %v329 = vunpack.c.h.b16 %v56
    %v330 = vunpack.c.l.b16 %v57
    %v331 = vunpack.c.h.b16 %v57
    %v332 = vunpack.c.l.b16 %v58
    %v333 = vunpack.c.h.b16 %v58
    %v334 = vunpack.c.l.b16 %v59
    %v335 = vunpack.c.h.b16 %v59
    %v336 = vunpack.c.l.b16 %v60
    %v337 = vunpack.c.h.b16 %v60
    %v338 = vunpack.c.l.b16 %v61
    %v339 = vunpack.c.h.b16 %v61
    %v340 = vunpack.c.l.b16 %v62
    %v341 = vunpack.c.h.b16 %v62
    %v342 = vunpack.c.l.b16 %v63
    %v343 = vunpack.c.h.b16 %v63
    %v344 = vunpack.c.l.b16 %v64
    %v345 = vunpack.c.h.b16 %v64
    %v346 = vunpack.c.l.b16 %v65
    %v347 = vunpack.c.h.b16 %v65
    %v348 = vunpack.c.l.b16 %v66
    %v349 = vunpack.c.h.b16 %v66
    %v350 = vunpack.c.l.b16 %v67
    %v351 = vunpack.c.h.b16 %v67
    %v352 = vunpack.c.l.b16 %v68
    %v353 = vunpack.c.h.b16 %v68
    %v354 = vunpack.c.l.b16 %v69
    %v355 = vunpack.c.h.b16 %v69
    %v356 = vunpack.c.l.b16 %v70
    %v357 = vunpack.c.h.b16 %v70
    %v358 = vunpack.c.l.b16 %v71
    %v359 = vunpack.c.h.b16 %v71
    %v360 = vunpack.c.l.b16 %v72
    %v361 = vunpack.c.h.b16 %v72
    %v362 = vunpack.c.l.b16 %v73
    %v363 = vunpack.c.h.b16 %v73
    %v364 = vunpack.c.l.b16 %v74
    %v365 = vunpack.c.h.b16 %v74
    %v366 = vunpack.c.l.b16 %v75
    %v367 = vunpack.c.h.b16 %v75
    %v368 = vunpack.c.l.b16 %v76
    %v369 = vunpack.c.h.b16 %v76
    %v370 = vunpack.c.l.b16 %v77
    %v371 = vunpack.c.h.b16 %v77
    %v372 = vunpack.c.l.b16 %v78
    %v373 = vunpack.c.h.b16 %v78
    %v374 = vunpack.c.l.b16 %v79
    %v375 = vunpack.c.h.b16 %v79
    %v376 = vunpack.c.l.b16 %v80
    %v377 = vunpack.c.h.b16 %v80
    %v378 = vunpack.c.l.b16 %v81
    %v379 = vunpack.c.h.b16 %v81
    %v380 = vunpack.c.l.b16 %v82
    %v381 = vunpack.c.h.b16 %v82
    %v382 = vunpack.c.l.b16 %v83
    %v383 = vunpack.c.h.b16 %v83
    %v384 = vunpack.c.l.b16 %v84
    %v385 = vunpack.c.h.b16 %v84
    %v386 = vunpack.c.l.b16 %v85
    %v387 = vunpack.c.h.b16 %v85
    %v388 = vunpack.c.l.b16 %v86
    %v389 = vunpack.c.h.b16 %v86
    %v390 = vunpack.c.l.b16 %v87
    %v391 = vunpack.c.h.b16 %v87
    %v392 = vunpack.c.l.b16 %v88
    %v393 = vunpack.c.h.b16 %v88
    %v394 = vunpack.c.l.b16 %v89
    %v395 = vunpack.c.h.b16 %v89
    %v396 = vunpack.c.l.b16 %v90
    %v397 = vunpack.c.h.b16 %v90
    %v398 = vunpack.c.l.b16 %v91
    %v399 = vunpack.c.h.b16 %v91
    %v400 = vunpack.c.l.b16 %v92
    %v401 = vunpack.c.h.b16 %v92
    %v402 = vunpack.c.l.b16 %v93
    %v403 = vunpack.c.h.b16 %v93
    %v404 = vunpack.c.l.b16 %v94
    %v405 = vunpack.c.h.b16 %v94
    %v406 = vunpack.c.l.b16 %v95
    %v407 = vunpack.c.h.b16 %v95
    %v408 = vunpack.c.l.b16 %v96
    %v409 = vunpack.c.h.b16 %v96
    %v410 = vunpack.c.l.b16 %v97
    %v411 = vunpack.c.h.b16 %v97
    %v412 = vunpack.c.l.b16 %v98
    %v413 = vunpack.c.h.b16 %v98
    %v414 = vunpack.c.l.b16 %v99
    %v415 = vunpack.c.h.b16 %v99
    %v416 = vunpack.c.l.b16 %v100
    %v417 = vunpack.c.h.b16 %v100
    %v418 = vunpack.c.l.b16 %v101
    %v419 = vunpack.c.h.b16 %v101
    %v420 = vunpack.c.l.b16 %v102
    %v421 = vunpack.c.h.b16 %v102
    %v422 = vunpack.c.l.b16 %v103
    %v423 = vunpack.c.h.b16 %v103
    %v424 = vunpack.c.l.b16 %v104
    %v425 = vunpack.c.h.b16 %v104
    %v426 = vunpack.c.l.b16 %v105
    %v427 = vunpack.c.h.b16 %v105
    %v428 = vunpack.c.l.b16 %v106
    %v429 = vunpack.c.h.b16 %v106
    %v430 = vunpack.c.l.b16 %v107
    %v431 = vunpack.c.h.b16 %v107
    %v432 = vunpack.c.l.b16 %v108
    %v433 = vunpack.c.h.b16 %v108
    %v434 = vunpack.c.l.b16 %v109
    %v435 = vunpack.c.h.b16 %v109
    %v436 = vunpack.c.l.b16 %v110
    %v437 = vunpack.c.h.b16 %v110
    %v438 = vpack.c.b16 %v318, %v310
    %v439 = vpack.c.b16 %v319, %v311
    %v440 = vpack.c.b16 %v320, %v312
    %v441 = vpack.c.b16 %v321, %v313
    %v442 = vpack.c.b16 %v322, %v314
    %v443 = vpack.c.b16 %v323, %v315
    %v444 = vpack.c.b16 %v324, %v316
    %v445 = vpack.c.b16 %v325, %v317
    %v446 = vpack.c.b16 %v334, %v326
    %v447 = vpack.c.b16 %v335, %v327
    %v448 = vpack.c.b16 %v336, %v328
    %v449 = vpack.c.b16 %v337, %v329
    %v450 = vpack.c.b16 %v338, %v330
    %v451 = vpack.c.b16 %v339, %v331
    %v452 = vpack.c.b16 %v340, %v332
    %v453 = vpack.c.b16 %v341, %v333
    %v454 = vpack.c.b16 %v350, %v342
    %v455 = vpack.c.b16 %v351, %v343
    %v456 = vpack.c.b16 %v352, %v344
    %v457 = vpack.c.b16 %v353, %v345
    %v458 = vpack.c.b16 %v354, %v346
    %v459 = vpack.c.b16 %v355, %v347
    %v460 = vpack.c.b16 %v356, %v348
    %v461 = vpack.c.b16 %v357, %v349
    %v462 = vpack.c.b16 %v366, %v358
    %v463 = vpack.c.b16 %v367, %v359
    %v464 = vpack.c.b16 %v368, %v360
    %v465 = vpack.c.b16 %v369, %v361
    %v466 = vpack.c.b16 %v370, %v362
    %v467 = vpack.c.b16 %v371, %v363
    %v468 = vpack.c.b16 %v372, %v364
    %v469 = vpack.c.b16 %v373, %v365
    %v470 = vpack.c.b16 %v382, %v374
    %v471 = vpack.c.b16 %v383, %v375
    %v472 = vpack.c.b16 %v384, %v376
    %v473 = vpack.c.b16 %v385, %v377
    %v474 = vpack.c.b16 %v386, %v378
    %v475 = vpack.c.b16 %v387, %v379
    %v476 = vpack.c.b16 %v388, %v380
    %v477 = vpack.c.b16 %v389, %v381
    %v478 = vpack.c.b16 %v398, %v390
    %v479 = vpack.c.b16 %v399, %v391
    %v480 = vpack.c.b16 %v400, %v392
    %v481 = vpack.c.b16 %v401, %v393
    %v482 = vpack.c.b16 %v402, %v394
    %v483 = vpack.c.b16 %v403, %v395
    %v484 = vpack.c.b16 %v404, %v396
    %v485 = vpack.c.b16 %v405, %v397
    %v486 = vpack.c.b16 %v414, %v406
    %v487 = vpack.c.b16 %v415, %v407
    %v488 = vpack.c.b16 %v416, %v408
    %v489 = vpack.c.b16 %v417, %v409
    %v490 = vpack.c.b16 %v418, %v410
    %v491 = vpack.c.b16 %v419, %v411
    %v492 = vpack.c.b16 %v420, %v412
    %v493 = vpack.c.b16 %v421, %v413
    %v494 = vpack.c.b16 %v430, %v422
    %v495 = vpack.c.b16 %v431, %v423
    %v496 = vpack.c.b16 %v432, %v424
    %v497 = vpack.c.b16 %v433, %v425
    %v498 = vpack.c.b16 %v434, %v426
    %v499 = vpack.c.b16 %v435, %v427
    %v500 = vpack.c.b16 %v436, %v428
    %v501 = vpack.c.b16 %v437, %v429
    %v694 = vunpack.c.l.b16 %v111
    %v695 = vunpack.c.l.b16 %v112
    %v696 = vunpack.c.l.b16 %v113
    %v697 = vunpack.c.l.b16 %v114
    %v698 = vunpack.c.l.b16 %v115
    %v699 = vunpack.c.l.b16 %v116
    %v700 = vunpack.c.l.b16 %v117
    %v701 = vunpack.c.l.b16 %v118
    %v702 = vunpack.c.l.b16 %v119
    %v703 = vunpack.c.l.b16 %v120
    %v704 = vunpack.c.l.b16 %v121
    %v705 = vunpack.c.l.b16 %v122
    %v706 = vunpack.c.l.b16 %v123
    %v707 = vunpack.c.l.b16 %v124
    %v708 = vunpack.c.l.b16 %v125
    %v709 = vunpack.c.l.b16 %v126
    %v710 = vunpack.c.l.b16 %v127
    %v711 = vunpack.c.l.b16 %v128
    %v712 = vunpack.c.l.b16 %v129
    %v713 = vunpack.c.l.b16 %v130
    %v714 = vunpack.c.l.b16 %v131
    %v715 = vunpack.c.l.b16 %v132
    %v716 = vunpack.c.l.b16 %v133
    %v717 = vunpack.c.l.b16 %v134
    %v718 = vunpack.c.l.b16 %v135
    %v719 = vunpack.c.l.b16 %v136
    %v720 = vunpack.c.l.b16 %v137
    %v721 = vunpack.c.l.b16 %v138
    %v722 = vunpack.c.l.b16 %v139
    %v723 = vunpack.c.l.b16 %v140
    %v724 = vunpack.c.l.b16 %v141
    %v725 = vunpack.c.l.b16 %v142
    %v726 = vunpack.c.l.b16 %v143
    %v727 = vunpack.c.l.b16 %v144
    %v728 = vunpack.c.l.b16 %v145
    %v729 = vunpack.c.l.b16 %v146
    %v730 = vunpack.c.l.b16 %v147
    %v731 = vunpack.c.l.b16 %v148
    %v732 = vunpack.c.l.b16 %v149
    %v733 = vunpack.c.l.b16 %v150
    %v734 = vunpack.c.l.b16 %v151
    %v735 = vunpack.c.l.b16 %v152
    %v736 = vunpack.c.l.b16 %v153
    %v737 = vunpack.c.l.b16 %v154
    %v738 = vunpack.c.l.b16 %v155
    %v739 = vunpack.c.l.b16 %v156
    %v740 = vunpack.c.l.b16 %v157
    %v741 = vunpack.c.l.b16 %v158
    %v742 = vunpack.c.l.b16 %v159
    %v743 = vunpack.c.l.b16 %v160
    %v744 = vunpack.c.l.b16 %v161
    %v745 = vunpack.c.l.b16 %v162
    %v746 = vunpack.c.l.b16 %v163
    %v747 = vunpack.c.l.b16 %v164
    %v748 = vunpack.c.l.b16 %v165
    %v749 = vunpack.c.l.b16 %v166
    %v750 = vunpack.c.l.b16 %v167
    %v751 = vunpack.c.l.b16 %v168
    %v752 = vunpack.c.l.b16 %v169
    %v753 = vunpack.c.l.b16 %v170
    %v754 = vunpack.c.l.b16 %v171
    %v755 = vunpack.c.l.b16 %v172
    %v756 = vunpack.c.l.b16 %v173
    %v757 = vunpack.c.l.b16 %v174
    %v758 = vunpack.c.l.b16 %v175
    %v759 = vunpack.c.l.b16 %v176
    %v760 = vunpack.c.l.b16 %v177
    %v761 = vunpack.c.l.b16 %v178
    %v762 = vunpack.c.l.b16 %v179
    %v763 = vunpack.c.l.b16 %v180
    %v764 = vunpack.c.l.b16 %v181
    %v765 = vunpack.c.l.b16 %v182
    %v766 = vunpack.c.l.b16 %v183
    %v767 = vunpack.c.l.b16 %v184
    %v768 = vunpack.c.l.b16 %v185
    %v769 = vunpack.c.l.b16 %v186
    %v770 = vunpack.c.l.b16 %v187
    %v771 = vunpack.c.l.b16 %v188
    %v772 = vunpack.c.l.b16 %v189
    %v773 = vunpack.c.l.b16 %v190
    %v774 = vunpack.c.l.b16 %v191
    %v775 = vunpack.c.l.b16 %v192
    %v776 = vunpack.c.l.b16 %v193
    %v777 = vunpack.c.l.b16 %v194
    %v778 = vunpack.c.l.b16 %v195
    %v779 = vunpack.c.l.b16 %v196
    %v780 = vunpack.c.l.b16 %v197
    %v781 = vunpack.c.l.b16 %v198
    %v782 = vunpack.c.l.b16 %v199
    %v783 = vunpack.c.l.b16 %v200
    %v784 = vunpack.c.l.b16 %v201
    %v785 = vunpack.c.l.b16 %v202
    %v786 = vunpack.c.l.b16 %v203
    %v787 = vunpack.c.l.b16 %v204
    %v788 = vunpack.c.l.b16 %v205
    %v789 = vunpack.c.l.b16 %v206
    %v790 = vunpack.c.l.b16 %v207
    %v791 = vunpack.c.l.b16 %v208
    %v792 = vunpack.c.l.b16 %v209
    %v793 = vunpack.c.l.b16 %v210
    %v794 = vunpack.c.l.b16 %v211
    %v795 = vunpack.c.l.b16 %v212
    %v796 = vunpack.c.l.b16 %v213
    %v797 = vunpack.c.l.b16 %v214
    %v798 = vunpack.c.l.b16 %v215
    %v799 = vunpack.c.l.b16 %v216
    %v800 = vunpack.c.l.b16 %v217
    %v801 = vunpack.c.l.b16 %v218
    %v802 = vunpack.c.l.b16 %v219
    %v803 = vunpack.c.l.b16 %v220
    %v804 = vunpack.c.l.b16 %v221
    %v805 = vunpack.c.l.b16 %v222
    %v806 = vunpack.c.l.b16 %v223
    %v807 = vunpack.c.l.b16 %v224
    %v808 = vunpack.c.l.b16 %v225
    %v809 = vunpack.c.l.b16 %v226
    %v810 = vunpack.c.l.b16 %v227
    %v811 = vunpack.c.l.b16 %v228
    %v812 = vunpack.c.l.b16 %v229
    %v813 = vunpack.c.l.b16 %v230
    %v814 = vunpack.c.l.b16 %v231
    %v815 = vunpack.c.l.b16 %v232
    %v816 = vunpack.c.l.b16 %v233
    %v817 = vunpack.c.l.b16 %v234
    %v818 = vunpack.c.l.b16 %v235
    %v819 = vunpack.c.l.b16 %v236
    %v820 = vunpack.c.l.b16 %v237
    %v821 = vunpack.c.l.b16 %v238
    %v822 = vpack.c.b16 %v695, %v694
    %v823 = vpack.c.b16 %v697, %v696
    %v824 = vpack.c.b16 %v699, %v698
    %v825 = vpack.c.b16 %v701, %v700
    %v826 = vpack.c.b16 %v703, %v702
    %v827 = vpack.c.b16 %v705, %v704
    %v828 = vpack.c.b16 %v707, %v706
    %v829 = vpack.c.b16 %v709, %v708
    %v830 = vpack.c.b16 %v711, %v710
    %v831 = vpack.c.b16 %v713, %v712
    %v832 = vpack.c.b16 %v715, %v714
    %v833 = vpack.c.b16 %v717, %v716
    %v834 = vpack.c.b16 %v719, %v718
    %v835 = vpack.c.b16 %v721, %v720
    %v836 = vpack.c.b16 %v723, %v722
    %v837 = vpack.c.b16 %v725, %v724
    %v838 = vpack.c.b16 %v727, %v726
    %v839 = vpack.c.b16 %v729, %v728
    %v840 = vpack.c.b16 %v731, %v730
    %v841 = vpack.c.b16 %v733, %v732
    %v842 = vpack.c.b16 %v735, %v734
    %v843 = vpack.c.b16 %v737, %v736
    %v844 = vpack.c.b16 %v739, %v738
    %v845 = vpack.c.b16 %v741, %v740
    %v846 = vpack.c.b16 %v743, %v742
    %v847 = vpack.c.b16 %v745, %v744
    %v848 = vpack.c.b16 %v747, %v746
    %v849 = vpack.c.b16 %v749, %v748
    %v850 = vpack.c.b16 %v751, %v750
    %v851 = vpack.c.b16 %v753, %v752
    %v852 = vpack.c.b16 %v755, %v754
    %v853 = vpack.c.b16 %v757, %v756
    %v854 = vpack.c.b16 %v759, %v758
    %v855 = vpack.c.b16 %v761, %v760
    %v856 = vpack.c.b16 %v763, %v762
    %v857 = vpack.c.b16 %v765, %v764
    %v858 = vpack.c.b16 %v767, %v766
    %v859 = vpack.c.b16 %v769, %v768
    %v860 = vpack.c.b16 %v771, %v770
    %v861 = vpack.c.b16 %v773, %v772
    %v862 = vpack.c.b16 %v775, %v774
    %v863 = vpack.c.b16 %v777, %v776
    %v864 = vpack.c.b16 %v779, %v778
    %v865 = vpack.c.b16 %v781, %v780
    %v866 = vpack.c.b16 %v783, %v782
    %v867 = vpack.c.b16 %v785, %v784
    %v868 = vpack.c.b16 %v787, %v786
    %v869 = vpack.c.b16 %v789, %v788
    %v870 = vpack.c.b16 %v791, %v790
    %v871 = vpack.c.b16 %v793, %v792
    %v872 = vpack.c.b16 %v795, %v794
    %v873 = vpack.c.b16 %v797, %v796
    %v874 = vpack.c.b16 %v799, %v798
    %v875 = vpack.c.b16 %v801, %v800
    %v876 = vpack.c.b16 %v803, %v802
    %v877 = vpack.c.b16 %v805, %v804
    %v878 = vpack.c.b16 %v807, %v806
    %v879 = vpack.c.b16 %v809, %v808
    %v880 = vpack.c.b16 %v811, %v810
    %v881 = vpack.c.b16 %v813, %v812
    %v882 = vpack.c.b16 %v815, %v814
    %v883 = vpack.c.b16 %v817, %v816
    %v884 = vpack.c.b16 %v819, %v818
    %v885 = vpack.c.b16 %v821, %v820
    %950 = vmatprep.subr.bf16.mxu0 0
    %951 = vmatpush1.bf16.msra.mxu0 %v829
    %952 = vmatprep.subr.bf16.mxu0 0
    %953 = vmatpush1.bf16.msra.mxu0 %v828
    %954 = vmatprep.subr.bf16.mxu0 0
    %955 = vmatpush1.bf16.msra.mxu0 %v827
    %956 = vmatprep.subr.bf16.mxu0 0
    %957 = vmatpush1.bf16.msra.mxu0 %v826
    %958 = vmatprep.subr.bf16.mxu0 0
    %959 = vmatpush1.bf16.msra.mxu0 %v825
    %960 = vmatprep.subr.bf16.mxu0 0
    %961 = vmatpush1.bf16.msra.mxu0 %v824
    %962 = vmatprep.subr.bf16.mxu0 0
    %963 = vmatpush1.bf16.msra.mxu0 %v823
    %964 = vmatprep.subr.bf16.mxu0 0
    %965 = vmatpush1.bf16.msra.mxu0 %v822
    %966 = vmatprep.subr.bf16.mxu0 0
    %967 = vmatpush2.bf16.msra.mxu0 %v837
    %968 = vmatprep.subr.bf16.mxu0 0
    %969 = vmatpush2.bf16.msra.mxu0 %v836
    %970 = vmatprep.subr.bf16.mxu0 0
    %971 = vmatpush2.bf16.msra.mxu0 %v835
    %972 = vmatprep.subr.bf16.mxu0 0
    %973 = vmatpush2.bf16.msra.mxu0 %v834
    %974 = vmatprep.subr.bf16.mxu0 0
    %975 = vmatpush2.bf16.msra.mxu0 %v833
    %976 = vmatprep.subr.bf16.mxu0 0
    %977 = vmatpush2.bf16.msra.mxu0 %v832
    %978 = vmatprep.subr.bf16.mxu0 0
    %979 = vmatpush2.bf16.msra.mxu0 %v831
    %980 = vmatprep.subr.bf16.mxu0 0
    %981 = vmatpush2.bf16.msra.mxu0 %v830
    %982 = vmatprep.mubr.bf16.mxu0 %v439
    %983 = vmatmul.mubr.bf16.gmra.mxu0 %v438
    %v984 = vpop.f32.mrf.mxu0
    %v985 = vadd.f32 %v244, %v984
    %v986 = vpop.f32.mrf.mxu0
    %v987 = vpop.f32.mrf.mxu0
    %v988 = vadd.f32 %v244, %v987
    %v989 = vpop.f32.mrf.mxu0
    %990 = vmatprep.mubr.bf16.mxu0 %v447
    %991 = vmatmul.mubr.bf16.gmra.mxu0 %v446
    %v992 = vpop.f32.mrf.mxu0
    %v993 = vadd.f32 %v244, %v992
    %v994 = vpop.f32.mrf.mxu0
    %v995 = vpop.f32.mrf.mxu0
    %v996 = vadd.f32 %v244, %v995
    %v997 = vpop.f32.mrf.mxu0
    %998 = vmatprep.mubr.bf16.mxu0 %v455
    %999 = vmatmul.mubr.bf16.gmra.mxu0 %v454
    %v1000 = vpop.f32.mrf.mxu0
    %v1001 = vadd.f32 %v244, %v1000
    %v1002 = vpop.f32.mrf.mxu0
    %v1003 = vpop.f32.mrf.mxu0
    %v1004 = vadd.f32 %v244, %v1003
    %v1005 = vpop.f32.mrf.mxu0
    %1006 = vmatprep.mubr.bf16.mxu0 %v463
    %1007 = vmatmul.mubr.bf16.gmra.mxu0 %v462
    %v1008 = vpop.f32.mrf.mxu0
    %v1009 = vadd.f32 %v244, %v1008
    %v1010 = vpop.f32.mrf.mxu0
    %v1011 = vpop.f32.mrf.mxu0
    %v1012 = vadd.f32 %v244, %v1011
    %v1013 = vpop.f32.mrf.mxu0
    %1014 = vmatprep.mubr.bf16.mxu0 %v471
    %1015 = vmatmul.mubr.bf16.gmra.mxu0 %v470
    %v1016 = vpop.f32.mrf.mxu0
    %v1017 = vadd.f32 %v244, %v1016
    %v1018 = vpop.f32.mrf.mxu0
    %v1019 = vpop.f32.mrf.mxu0
    %v1020 = vadd.f32 %v244, %v1019
    %v1021 = vpop.f32.mrf.mxu0
    %1022 = vmatprep.mubr.bf16.mxu0 %v479
    %1023 = vmatmul.mubr.bf16.gmra.mxu0 %v478
    %v1024 = vpop.f32.mrf.mxu0
    %v1025 = vadd.f32 %v244, %v1024
    %v1026 = vpop.f32.mrf.mxu0
    %v1027 = vpop.f32.mrf.mxu0
    %v1028 = vadd.f32 %v244, %v1027
    %v1029 = vpop.f32.mrf.mxu0
    %1030 = vmatprep.mubr.bf16.mxu0 %v487
    %1031 = vmatmul.mubr.bf16.gmra.mxu0 %v486
    %v1032 = vpop.f32.mrf.mxu0
    %v1033 = vadd.f32 %v244, %v1032
    %v1034 = vpop.f32.mrf.mxu0
    %v1035 = vpop.f32.mrf.mxu0
    %v1036 = vadd.f32 %v244, %v1035
    %v1037 = vpop.f32.mrf.mxu0
    %1038 = vmatprep.mubr.bf16.mxu0 %v495
    %1039 = vmatmul.mubr.bf16.gmra.mxu0 %v494
    %v1040 = vpop.f32.mrf.mxu0
    %v1041 = vadd.f32 %v244, %v1040
    %v1042 = vpop.f32.mrf.mxu0
    %v1043 = vpop.f32.mrf.mxu0
    %v1044 = vadd.f32 %v244, %v1043
    %v1045 = vpop.f32.mrf.mxu0
    %1046 = vdwg.mxu0
    %1047 = vmatprep.subr.bf16.mxu0 0
    %1048 = vmatpush1.bf16.msra.mxu0 %v845
    %1049 = vmatprep.subr.bf16.mxu0 0
    %1050 = vmatpush1.bf16.msra.mxu0 %v844
    %1051 = vmatprep.subr.bf16.mxu0 0
    %1052 = vmatpush1.bf16.msra.mxu0 %v843
    %1053 = vmatprep.subr.bf16.mxu0 0
    %1054 = vmatpush1.bf16.msra.mxu0 %v842
    %1055 = vmatprep.subr.bf16.mxu0 0
    %1056 = vmatpush1.bf16.msra.mxu0 %v841
    %1057 = vmatprep.subr.bf16.mxu0 0
    %1058 = vmatpush1.bf16.msra.mxu0 %v840
    %1059 = vmatprep.subr.bf16.mxu0 0
    %1060 = vmatpush1.bf16.msra.mxu0 %v839
    %1061 = vmatprep.subr.bf16.mxu0 0
    %1062 = vmatpush1.bf16.msra.mxu0 %v838
    %1063 = vmatprep.subr.bf16.mxu0 0
    %1064 = vmatpush2.bf16.msra.mxu0 %v853
    %1065 = vmatprep.subr.bf16.mxu0 0
    %1066 = vmatpush2.bf16.msra.mxu0 %v852
    %1067 = vmatprep.subr.bf16.mxu0 0
    %1068 = vmatpush2.bf16.msra.mxu0 %v851
    %1069 = vmatprep.subr.bf16.mxu0 0
    %1070 = vmatpush2.bf16.msra.mxu0 %v850
    %1071 = vmatprep.subr.bf16.mxu0 0
    %1072 = vmatpush2.bf16.msra.mxu0 %v849
    %1073 = vmatprep.subr.bf16.mxu0 0
    %1074 = vmatpush2.bf16.msra.mxu0 %v848
    %1075 = vmatprep.subr.bf16.mxu0 0
    %1076 = vmatpush2.bf16.msra.mxu0 %v847
    %1077 = vmatprep.subr.bf16.mxu0 0
    %1078 = vmatpush2.bf16.msra.mxu0 %v846
    %1079 = vmatprep.mubr.bf16.mxu0 %v441
    %1080 = vmatmul.mubr.bf16.gmra.mxu0 %v440
    %v1081 = vpop.f32.mrf.mxu0
    %v1082 = vadd.f32 %v985, %v1081
    %v1083 = vpop.f32.mrf.mxu0
    %v1084 = vpop.f32.mrf.mxu0
    %v1085 = vadd.f32 %v988, %v1084
    %v1086 = vpop.f32.mrf.mxu0
    %1087 = vmatprep.mubr.bf16.mxu0 %v449
    %1088 = vmatmul.mubr.bf16.gmra.mxu0 %v448
    %v1089 = vpop.f32.mrf.mxu0
    %v1090 = vadd.f32 %v993, %v1089
    %v1091 = vpop.f32.mrf.mxu0
    %v1092 = vpop.f32.mrf.mxu0
    %v1093 = vadd.f32 %v996, %v1092
    %v1094 = vpop.f32.mrf.mxu0
    %1095 = vmatprep.mubr.bf16.mxu0 %v457
    %1096 = vmatmul.mubr.bf16.gmra.mxu0 %v456
    %v1097 = vpop.f32.mrf.mxu0
    %v1098 = vadd.f32 %v1001, %v1097
    %v1099 = vpop.f32.mrf.mxu0
    %v1100 = vpop.f32.mrf.mxu0
    %v1101 = vadd.f32 %v1004, %v1100
    %v1102 = vpop.f32.mrf.mxu0
    %1103 = vmatprep.mubr.bf16.mxu0 %v465
    %1104 = vmatmul.mubr.bf16.gmra.mxu0 %v464
    %v1105 = vpop.f32.mrf.mxu0
    %v1106 = vadd.f32 %v1009, %v1105
    %v1107 = vpop.f32.mrf.mxu0
    %v1108 = vpop.f32.mrf.mxu0
    %v1109 = vadd.f32 %v1012, %v1108
    %v1110 = vpop.f32.mrf.mxu0
    %1111 = vmatprep.mubr.bf16.mxu0 %v473
    %1112 = vmatmul.mubr.bf16.gmra.mxu0 %v472
    %v1113 = vpop.f32.mrf.mxu0
    %v1114 = vadd.f32 %v1017, %v1113
    %v1115 = vpop.f32.mrf.mxu0
    %v1116 = vpop.f32.mrf.mxu0
    %v1117 = vadd.f32 %v1020, %v1116
    %v1118 = vpop.f32.mrf.mxu0
    %1119 = vmatprep.mubr.bf16.mxu0 %v481
    %1120 = vmatmul.mubr.bf16.gmra.mxu0 %v480
    %v1121 = vpop.f32.mrf.mxu0
    %v1122 = vadd.f32 %v1025, %v1121
    %v1123 = vpop.f32.mrf.mxu0
    %v1124 = vpop.f32.mrf.mxu0
    %v1125 = vadd.f32 %v1028, %v1124
    %v1126 = vpop.f32.mrf.mxu0
    %1127 = vmatprep.mubr.bf16.mxu0 %v489
    %1128 = vmatmul.mubr.bf16.gmra.mxu0 %v488
    %v1129 = vpop.f32.mrf.mxu0
    %v1130 = vadd.f32 %v1033, %v1129
    %v1131 = vpop.f32.mrf.mxu0
    %v1132 = vpop.f32.mrf.mxu0
    %v1133 = vadd.f32 %v1036, %v1132
    %v1134 = vpop.f32.mrf.mxu0
    %1135 = vmatprep.mubr.bf16.mxu0 %v497
    %1136 = vmatmul.mubr.bf16.gmra.mxu0 %v496
    %v1137 = vpop.f32.mrf.mxu0
    %v1138 = vadd.f32 %v1041, %v1137
    %v1139 = vpop.f32.mrf.mxu0
    %v1140 = vpop.f32.mrf.mxu0
    %v1141 = vadd.f32 %v1044, %v1140
    %v1142 = vpop.f32.mrf.mxu0
    %1143 = vdwg.mxu0
    %1144 = vmatprep.subr.bf16.mxu0 0
    %1145 = vmatpush1.bf16.msra.mxu0 %v861
    %1146 = vmatprep.subr.bf16.mxu0 0
    %1147 = vmatpush1.bf16.msra.mxu0 %v860
    %1148 = vmatprep.subr.bf16.mxu0 0
    %1149 = vmatpush1.bf16.msra.mxu0 %v859
    %1150 = vmatprep.subr.bf16.mxu0 0
    %1151 = vmatpush1.bf16.msra.mxu0 %v858
    %1152 = vmatprep.subr.bf16.mxu0 0
    %1153 = vmatpush1.bf16.msra.mxu0 %v857
    %1154 = vmatprep.subr.bf16.mxu0 0
    %1155 = vmatpush1.bf16.msra.mxu0 %v856
    %1156 = vmatprep.subr.bf16.mxu0 0
    %1157 = vmatpush1.bf16.msra.mxu0 %v855
    %1158 = vmatprep.subr.bf16.mxu0 0
    %1159 = vmatpush1.bf16.msra.mxu0 %v854
    %1160 = vmatprep.subr.bf16.mxu0 0
    %1161 = vmatpush2.bf16.msra.mxu0 %v869
    %1162 = vmatprep.subr.bf16.mxu0 0
    %1163 = vmatpush2.bf16.msra.mxu0 %v868
    %1164 = vmatprep.subr.bf16.mxu0 0
    %1165 = vmatpush2.bf16.msra.mxu0 %v867
    %1166 = vmatprep.subr.bf16.mxu0 0
    %1167 = vmatpush2.bf16.msra.mxu0 %v866
    %1168 = vmatprep.subr.bf16.mxu0 0
    %1169 = vmatpush2.bf16.msra.mxu0 %v865
    %1170 = vmatprep.subr.bf16.mxu0 0
    %1171 = vmatpush2.bf16.msra.mxu0 %v864
    %1172 = vmatprep.subr.bf16.mxu0 0
    %1173 = vmatpush2.bf16.msra.mxu0 %v863
    %1174 = vmatprep.subr.bf16.mxu0 0
    %1175 = vmatpush2.bf16.msra.mxu0 %v862
    %1176 = vmatprep.mubr.bf16.mxu0 %v443
    %1177 = vmatmul.mubr.bf16.gmra.mxu0 %v442
    %v1178 = vpop.f32.mrf.mxu0
    %v1179 = vadd.f32 %v1082, %v1178
    %v1180 = vpop.f32.mrf.mxu0
    %v1181 = vpop.f32.mrf.mxu0
    %v1182 = vadd.f32 %v1085, %v1181
    %v1183 = vpop.f32.mrf.mxu0
    %1184 = vmatprep.mubr.bf16.mxu0 %v451
    %1185 = vmatmul.mubr.bf16.gmra.mxu0 %v450
    %v1186 = vpop.f32.mrf.mxu0
    %v1187 = vadd.f32 %v1090, %v1186
    %v1188 = vpop.f32.mrf.mxu0
    %v1189 = vpop.f32.mrf.mxu0
    %v1190 = vadd.f32 %v1093, %v1189
    %v1191 = vpop.f32.mrf.mxu0
    %1192 = vmatprep.mubr.bf16.mxu0 %v459
    %1193 = vmatmul.mubr.bf16.gmra.mxu0 %v458
    %v1194 = vpop.f32.mrf.mxu0
    %v1195 = vadd.f32 %v1098, %v1194
    %v1196 = vpop.f32.mrf.mxu0
    %v1197 = vpop.f32.mrf.mxu0
    %v1198 = vadd.f32 %v1101, %v1197
    %v1199 = vpop.f32.mrf.mxu0
    %1200 = vmatprep.mubr.bf16.mxu0 %v467
    %1201 = vmatmul.mubr.bf16.gmra.mxu0 %v466
    %v1202 = vpop.f32.mrf.mxu0
    %v1203 = vadd.f32 %v1106, %v1202
    %v1204 = vpop.f32.mrf.mxu0
    %v1205 = vpop.f32.mrf.mxu0
    %v1206 = vadd.f32 %v1109, %v1205
    %v1207 = vpop.f32.mrf.mxu0
    %1208 = vmatprep.mubr.bf16.mxu0 %v475
    %1209 = vmatmul.mubr.bf16.gmra.mxu0 %v474
    %v1210 = vpop.f32.mrf.mxu0
    %v1211 = vadd.f32 %v1114, %v1210
    %v1212 = vpop.f32.mrf.mxu0
    %v1213 = vpop.f32.mrf.mxu0
    %v1214 = vadd.f32 %v1117, %v1213
    %v1215 = vpop.f32.mrf.mxu0
    %1216 = vmatprep.mubr.bf16.mxu0 %v483
    %1217 = vmatmul.mubr.bf16.gmra.mxu0 %v482
    %v1218 = vpop.f32.mrf.mxu0
    %v1219 = vadd.f32 %v1122, %v1218
    %v1220 = vpop.f32.mrf.mxu0
    %v1221 = vpop.f32.mrf.mxu0
    %v1222 = vadd.f32 %v1125, %v1221
    %v1223 = vpop.f32.mrf.mxu0
    %1224 = vmatprep.mubr.bf16.mxu0 %v491
    %1225 = vmatmul.mubr.bf16.gmra.mxu0 %v490
    %v1226 = vpop.f32.mrf.mxu0
    %v1227 = vadd.f32 %v1130, %v1226
    %v1228 = vpop.f32.mrf.mxu0
    %v1229 = vpop.f32.mrf.mxu0
    %v1230 = vadd.f32 %v1133, %v1229
    %v1231 = vpop.f32.mrf.mxu0
    %1232 = vmatprep.mubr.bf16.mxu0 %v499
    %1233 = vmatmul.mubr.bf16.gmra.mxu0 %v498
    %v1234 = vpop.f32.mrf.mxu0
    %v1235 = vadd.f32 %v1138, %v1234
    %v1236 = vpop.f32.mrf.mxu0
    %v1237 = vpop.f32.mrf.mxu0
    %v1238 = vadd.f32 %v1141, %v1237
    %v1239 = vpop.f32.mrf.mxu0
    %1240 = vdwg.mxu0
    %1241 = vmatprep.subr.bf16.mxu0 0
    %1242 = vmatpush1.bf16.msra.mxu0 %v877
    %1243 = vmatprep.subr.bf16.mxu0 0
    %1244 = vmatpush1.bf16.msra.mxu0 %v876
    %1245 = vmatprep.subr.bf16.mxu0 0
    %1246 = vmatpush1.bf16.msra.mxu0 %v875
    %1247 = vmatprep.subr.bf16.mxu0 0
    %1248 = vmatpush1.bf16.msra.mxu0 %v874
    %1249 = vmatprep.subr.bf16.mxu0 0
    %1250 = vmatpush1.bf16.msra.mxu0 %v873
    %1251 = vmatprep.subr.bf16.mxu0 0
    %1252 = vmatpush1.bf16.msra.mxu0 %v872
    %1253 = vmatprep.subr.bf16.mxu0 0
    %1254 = vmatpush1.bf16.msra.mxu0 %v871
    %1255 = vmatprep.subr.bf16.mxu0 0
    %1256 = vmatpush1.bf16.msra.mxu0 %v870
    %1257 = vmatprep.subr.bf16.mxu0 0
    %1258 = vmatpush2.bf16.msra.mxu0 %v885
    %1259 = vmatprep.subr.bf16.mxu0 0
    %1260 = vmatpush2.bf16.msra.mxu0 %v884
    %1261 = vmatprep.subr.bf16.mxu0 0
    %1262 = vmatpush2.bf16.msra.mxu0 %v883
    %1263 = vmatprep.subr.bf16.mxu0 0
    %1264 = vmatpush2.bf16.msra.mxu0 %v882
    %1265 = vmatprep.subr.bf16.mxu0 0
    %1266 = vmatpush2.bf16.msra.mxu0 %v881
    %1267 = vmatprep.subr.bf16.mxu0 0
    %1268 = vmatpush2.bf16.msra.mxu0 %v880
    %1269 = vmatprep.subr.bf16.mxu0 0
    %1270 = vmatpush2.bf16.msra.mxu0 %v879
    %1271 = vmatprep.subr.bf16.mxu0 0
    %1272 = vmatpush2.bf16.msra.mxu0 %v878
    %1273 = vmatprep.mubr.bf16.mxu0 %v445
    %1274 = vmatmul.mubr.bf16.gmra.mxu0 %v444
    %v1275 = vpop.f32.mrf.mxu0
    %v1276 = vadd.f32 %v1179, %v1275
    %v1277 = vpop.f32.mrf.mxu0
    %v1278 = vpop.f32.mrf.mxu0
    %v1279 = vadd.f32 %v1182, %v1278
    %v1280 = vpop.f32.mrf.mxu0
    %1281 = vmatprep.mubr.bf16.mxu0 %v453
    %1282 = vmatmul.mubr.bf16.gmra.mxu0 %v452
    %v1283 = vpop.f32.mrf.mxu0
    %v1284 = vadd.f32 %v1187, %v1283
    %v1285 = vpop.f32.mrf.mxu0
    %v1286 = vpop.f32.mrf.mxu0
    %v1287 = vadd.f32 %v1190, %v1286
    %v1288 = vpop.f32.mrf.mxu0
    %1289 = vmatprep.mubr.bf16.mxu0 %v461
    %1290 = vmatmul.mubr.bf16.gmra.mxu0 %v460
    %v1291 = vpop.f32.mrf.mxu0
    %v1292 = vadd.f32 %v1195, %v1291
    %v1293 = vpop.f32.mrf.mxu0
    %v1294 = vpop.f32.mrf.mxu0
    %v1295 = vadd.f32 %v1198, %v1294
    %v1296 = vpop.f32.mrf.mxu0
    %1297 = vmatprep.mubr.bf16.mxu0 %v469
    %1298 = vmatmul.mubr.bf16.gmra.mxu0 %v468
    %v1299 = vpop.f32.mrf.mxu0
    %v1300 = vadd.f32 %v1203, %v1299
    %v1301 = vpop.f32.mrf.mxu0
    %v1302 = vpop.f32.mrf.mxu0
    %v1303 = vadd.f32 %v1206, %v1302
    %v1304 = vpop.f32.mrf.mxu0
    %1305 = vmatprep.mubr.bf16.mxu0 %v477
    %1306 = vmatmul.mubr.bf16.gmra.mxu0 %v476
    %v1307 = vpop.f32.mrf.mxu0
    %v1308 = vadd.f32 %v1211, %v1307
    %v1309 = vpop.f32.mrf.mxu0
    %v1310 = vpop.f32.mrf.mxu0
    %v1311 = vadd.f32 %v1214, %v1310
    %v1312 = vpop.f32.mrf.mxu0
    %1313 = vmatprep.mubr.bf16.mxu0 %v485
    %1314 = vmatmul.mubr.bf16.gmra.mxu0 %v484
    %v1315 = vpop.f32.mrf.mxu0
    %v1316 = vadd.f32 %v1219, %v1315
    %v1317 = vpop.f32.mrf.mxu0
    %v1318 = vpop.f32.mrf.mxu0
    %v1319 = vadd.f32 %v1222, %v1318
    %v1320 = vpop.f32.mrf.mxu0
    %1321 = vmatprep.mubr.bf16.mxu0 %v493
    %1322 = vmatmul.mubr.bf16.gmra.mxu0 %v492
    %v1323 = vpop.f32.mrf.mxu0
    %v1324 = vadd.f32 %v1227, %v1323
    %v1325 = vpop.f32.mrf.mxu0
    %v1326 = vpop.f32.mrf.mxu0
    %v1327 = vadd.f32 %v1230, %v1326
    %v1328 = vpop.f32.mrf.mxu0
    %1329 = vmatprep.mubr.bf16.mxu0 %v501
    %1330 = vmatmul.mubr.bf16.gmra.mxu0 %v500
    %v1331 = vpop.f32.mrf.mxu0
    %v1332 = vadd.f32 %v1235, %v1331
    %v1333 = vpop.f32.mrf.mxu0
    %v1334 = vpop.f32.mrf.mxu0
    %v1335 = vadd.f32 %v1238, %v1334
    %v1336 = vpop.f32.mrf.mxu0
    %1337 = vdwg.mxu0
    %v1338 = vld [vmem:[%s3] sm:$0x1]
    %1339 = vxpose.xlu0.b32.start [1/16] %v1276, 128
    %1340 = vxpose.xlu0.b32.cont [2/16] %v1279, 128
    %1341 = vxpose.xlu0.b32.cont [3/16] %v1284, 128
    %1342 = vxpose.xlu0.b32.cont [4/16] %v1287, 128
    %1343 = vxpose.xlu0.b32.cont [5/16] %v1292, 128
    %1344 = vxpose.xlu0.b32.cont [6/16] %v1295, 128
    %1345 = vxpose.xlu0.b32.cont [7/16] %v1300, 128
    %1346 = vxpose.xlu0.b32.cont [8/16] %v1303, 128
    %1347 = vxpose.xlu0.b32.cont [9/16] %v1308, 128
    %1348 = vxpose.xlu0.b32.cont [10/16] %v1311, 128
    %1349 = vxpose.xlu0.b32.cont [11/16] %v1316, 128
    %1350 = vxpose.xlu0.b32.cont [12/16] %v1319, 128
    %1351 = vxpose.xlu0.b32.cont [13/16] %v1324, 128
    %1352 = vxpose.xlu0.b32.cont [14/16] %v1327, 128
    %1353 = vxpose.xlu0.b32.cont [15/16] %v1332, 128
    %1354 = vxpose.xlu0.b32.end [16/16] %v1335, 128
    %v1355 = vpop.trf.xlu0
    %v1356 = vpop.trf.xlu0
    %v1357 = vpop.trf.xlu0
    %v1358 = vpop.trf.xlu0
    %v1359 = vpop.trf.xlu0
    %v1360 = vpop.trf.xlu0
    %v1361 = vpop.trf.xlu0
    %v1362 = vpop.trf.xlu0
    %v1363 = vpop.trf.xlu0
    %v1364 = vpop.trf.xlu0
    %v1365 = vpop.trf.xlu0
    %v1366 = vpop.trf.xlu0
    %v1367 = vpop.trf.xlu0
    %v1368 = vpop.trf.xlu0
    %v1369 = vpop.trf.xlu0
    %v1370 = vpop.trf.xlu0
    %v1371 = vmax.f32 %v1355, %v1359
    %v1372 = vmax.f32 %v1356, %v1360
    %v1373 = vmax.f32 %v1357, %v1361
    %v1374 = vmax.f32 %v1358, %v1362
    %v1375 = vmax.f32 %v1371, %v1363
    %v1376 = vmax.f32 %v1372, %v1364
    %v1377 = vmax.f32 %v1373, %v1365
    %v1378 = vmax.f32 %v1374, %v1366
    %v1379 = vmax.f32 %v1375, %v1367
    %v1380 = vmax.f32 %v1376, %v1368
    %v1381 = vmax.f32 %v1377, %v1369
    %v1382 = vmax.f32 %v1378, %v1370
    %v1383 = vmax.f32 %v1379, %v1380
    %v1384 = vmax.f32 %v1381, %v1382
    %v1385 = vmax.f32 %v1383, %v1384
    %v1386 = vrot.slane %v1385, 4
    %v1387 = vmax.f32 %v1385, %v1386
    %v1388 = vrot.slane %v1387, 2
    %v1389 = vmax.f32 %v1387, %v1388
    %v1390 = vrot.slane %v1389, 1
    %v1391 = vmax.f32 %v1389, %v1390
    %v1392 = vsub.f32 %v1355, %v1391
    %v1393 = vsub.f32 %v1356, %v1391
    %v1394 = vsub.f32 %v1357, %v1391
    %v1395 = vsub.f32 %v1358, %v1391
    %v1396 = vsub.f32 %v1359, %v1391
    %v1397 = vsub.f32 %v1360, %v1391
    %v1398 = vsub.f32 %v1361, %v1391
    %v1399 = vsub.f32 %v1362, %v1391
    %v1400 = vsub.f32 %v1363, %v1391
    %v1401 = vsub.f32 %v1364, %v1391
    %v1402 = vsub.f32 %v1365, %v1391
    %v1403 = vsub.f32 %v1366, %v1391
    %v1404 = vsub.f32 %v1367, %v1391
    %v1405 = vsub.f32 %v1368, %v1391
    %v1406 = vsub.f32 %v1369, %v1391
    %v1407 = vsub.f32 %v1370, %v1391
    %v1408 = vmul.f32 %v1392, 1.442695
    %v1409 = vpow.pop %v1408
    %v1410 = vmul.f32 %v1393, 1.442695
    %v1411 = vpow.pop %v1410
    %v1412 = vmul.f32 %v1394, 1.442695
    %v1413 = vpow.pop %v1412
    %v1414 = vmul.f32 %v1395, 1.442695
    %v1415 = vpow.pop %v1414
    %v1416 = vmul.f32 %v1396, 1.442695
    %v1417 = vpow.pop %v1416
    %v1418 = vmul.f32 %v1397, 1.442695
    %v1419 = vpow.pop %v1418
    %v1420 = vmul.f32 %v1398, 1.442695
    %v1421 = vpow.pop %v1420
    %v1422 = vmul.f32 %v1399, 1.442695
    %v1423 = vpow.pop %v1422
    %v1424 = vmul.f32 %v1400, 1.442695
    %v1425 = vpow.pop %v1424
    %v1426 = vmul.f32 %v1401, 1.442695
    %v1427 = vpow.pop %v1426
    %v1428 = vmul.f32 %v1402, 1.442695
    %v1429 = vpow.pop %v1428
    %v1430 = vmul.f32 %v1403, 1.442695
    %v1431 = vpow.pop %v1430
    %v1432 = vmul.f32 %v1404, 1.442695
    %v1433 = vpow.pop %v1432
    %v1434 = vmul.f32 %v1405, 1.442695
    %v1435 = vpow.pop %v1434
    %v1436 = vmul.f32 %v1406, 1.442695
    %v1437 = vpow.pop %v1436
    %v1438 = vmul.f32 %v1407, 1.442695
    %v1439 = vpow.pop %v1438
    %v1440 = vadd.f32 %v1409, %v1411
    %v1441 = vadd.f32 %v1440, %v1413
    %v1442 = vadd.f32 %v1441, %v1415
    %v1443 = vadd.f32 %v1442, %v1417
    %v1444 = vadd.f32 %v1443, %v1419
    %v1445 = vadd.f32 %v1444, %v1421
    %v1446 = vadd.f32 %v1445, %v1423
    %v1447 = vadd.f32 %v1446, %v1425
    %v1448 = vadd.f32 %v1447, %v1427
    %v1449 = vadd.f32 %v1448, %v1429
    %v1450 = vadd.f32 %v1449, %v1431
    %v1451 = vadd.f32 %v1450, %v1433
    %v1452 = vadd.f32 %v1451, %v1435
    %v1453 = vadd.f32 %v1452, %v1437
    %v1454 = vadd.f32 %v1453, %v1439
    %v1455 = vrot.slane %v1454, 4
    %v1456 = vadd.f32 %v1454, %v1455
    %v1457 = vrot.slane %v1456, 2
    %v1458 = vadd.f32 %v1456, %v1457
    %v1459 = vrot.slane %v1458, 1
    %v1460 = vadd.f32 %v1458, %v1459
    %v1461 = vrcp.pop %v1460
    %v1462 = vmul.f32 1.0, %v1461
    %vm1463 = vcmp.le.f32.partialorder %v1462, 0.3
    %v1464 = vlaneseq
    %v1465 = vshrl.u32 %v1464, 7
    %v1466 = vadd.s32 %v1465, 8
    %v1467 = vadd.s32 %v1465, 16
    %v1468 = vadd.s32 %v1465, 24
    %v1469 = vadd.s32 %v1465, 32
    %v1470 = vadd.s32 %v1465, 40
    %v1471 = vadd.s32 %v1465, 48
    %v1472 = vadd.s32 %v1465, 56
    %v1473 = vadd.s32 %v1465, 64
    %v1474 = vadd.s32 %v1465, 72
    %v1475 = vadd.s32 %v1465, 80
    %v1476 = vadd.s32 %v1465, 88
    %v1477 = vadd.s32 %v1465, 96
    %v1478 = vadd.s32 %v1465, 104
    %v1479 = vadd.s32 %v1465, 112
    %v1480 = vadd.s32 %v1465, 120
    %v1481 = vcvt.s32.f32 %v1465
    %v1482 = vcvt.s32.f32 %v1466
    %v1483 = vcvt.s32.f32 %v1467
    %v1484 = vcvt.s32.f32 %v1468
    %v1485 = vcvt.s32.f32 %v1469
    %v1486 = vcvt.s32.f32 %v1470
    %v1487 = vcvt.s32.f32 %v1471
    %v1488 = vcvt.s32.f32 %v1472
    %v1489 = vcvt.s32.f32 %v1473
    %v1490 = vcvt.s32.f32 %v1474
    %v1491 = vcvt.s32.f32 %v1475
    %v1492 = vcvt.s32.f32 %v1476
    %v1493 = vcvt.s32.f32 %v1477
    %v1494 = vcvt.s32.f32 %v1478
    %v1495 = vcvt.s32.f32 %v1479
    %v1496 = vcvt.s32.f32 %v1480
    %vm1497 = vcmp.eq.f32.partialorder %v1355, %v1391
    %vm1498 = vcmp.eq.f32.partialorder %v1356, %v1391
    %vm1499 = vcmp.eq.f32.partialorder %v1357, %v1391
    %vm1500 = vcmp.eq.f32.partialorder %v1358, %v1391
    %vm1501 = vcmp.eq.f32.partialorder %v1359, %v1391
    %vm1502 = vcmp.eq.f32.partialorder %v1360, %v1391
    %vm1503 = vcmp.eq.f32.partialorder %v1361, %v1391
    %vm1504 = vcmp.eq.f32.partialorder %v1362, %v1391
    %vm1505 = vcmp.eq.f32.partialorder %v1363, %v1391
    %vm1506 = vcmp.eq.f32.partialorder %v1364, %v1391
    %vm1507 = vcmp.eq.f32.partialorder %v1365, %v1391
    %vm1508 = vcmp.eq.f32.partialorder %v1366, %v1391
    %vm1509 = vcmp.eq.f32.partialorder %v1367, %v1391
    %vm1510 = vcmp.eq.f32.partialorder %v1368, %v1391
    %vm1511 = vcmp.eq.f32.partialorder %v1369, %v1391
    %vm1512 = vcmp.eq.f32.partialorder %v1370, %v1391
    %v1513 = vsel %vm1497, %v1481, 128.0
    %v1514 = vsel %vm1498, %v1482, 128.0
    %v1515 = vsel %vm1499, %v1483, 128.0
    %v1516 = vsel %vm1500, %v1484, 128.0
    %v1517 = vsel %vm1501, %v1485, 128.0
    %v1518 = vsel %vm1502, %v1486, 128.0
    %v1519 = vsel %vm1503, %v1487, 128.0
    %v1520 = vsel %vm1504, %v1488, 128.0
    %v1521 = vsel %vm1505, %v1489, 128.0
    %v1522 = vsel %vm1506, %v1490, 128.0
    %v1523 = vsel %vm1507, %v1491, 128.0
    %v1524 = vsel %vm1508, %v1492, 128.0
    %v1525 = vsel %vm1509, %v1493, 128.0
    %v1526 = vsel %vm1510, %v1494, 128.0
    %v1527 = vsel %vm1511, %v1495, 128.0
    %v1528 = vsel %vm1512, %v1496, 128.0
    %v1529 = vmin.f32 %v1513, %v1517
    %v1530 = vmin.f32 %v1514, %v1518
    %v1531 = vmin.f32 %v1515, %v1519
    %v1532 = vmin.f32 %v1516, %v1520
    %v1533 = vmin.f32 %v1529, %v1521
    %v1534 = vmin.f32 %v1530, %v1522
    %v1535 = vmin.f32 %v1531, %v1523
    %v1536 = vmin.f32 %v1532, %v1524
    %v1537 = vmin.f32 %v1533, %v1525
    %v1538 = vmin.f32 %v1534, %v1526
    %v1539 = vmin.f32 %v1535, %v1527
    %v1540 = vmin.f32 %v1536, %v1528
    %v1541 = vmin.f32 %v1537, %v1538
    %v1542 = vmin.f32 %v1539, %v1540
    %v1543 = vmin.f32 %v1541, %v1542
    %v1544 = vrot.slane %v1543, 4
    %v1545 = vmin.f32 %v1543, %v1544
    %v1546 = vrot.slane %v1545, 2
    %v1547 = vmin.f32 %v1545, %v1546
    %v1548 = vrot.slane %v1547, 1
    %v1549 = vmin.f32 %v1547, %v1548
    %v1550 = vcvt.f32.s32.to.zero.pseudo %v1549
    %vm1551 = vcmp.eq.s32.totalorder %v1338, 0
    %vm1552 = vmand %vm1551, %vm1463
    %v1553 = vsel %vm1552, 3, %v1550
    %vm1554 = vcmp.eq.s32.totalorder %v1338, 1
    %vm1555 = vmand %vm1554, %vm1463
    %v1556 = vsel %vm1555, 5, %v1553
    %1557 = vst [vmem:[#allocation7] sm:$0x1] %v1556
    // Predicated region
    $region26: #{tpu_custom_call.1} parent=1 // pred_check
      _
    $region27: #{tpu_custom_call.1} parent=1 // pred_check_branch
      %1559 = sbr.rel (0) target = $region29
    $region28: #{tpu_custom_call.1} parent=1 // pred_region
      %s1561 = ssub.s32 16, 16
      %1562 = vsyncadd [#allocation4], %s1561
      %s1564 = sshll.u32 [#allocation7], 4
      %s1565 = int_to_ptr.vmem [resolvable:$true] %s1564
      %1567 = dma.vmem_to_hbm [thread:$0]  %s1565, 16, %s4, [#allocation4]
    $region29: #{tpu_custom_call.1} parent=1 // pred_fallthru
      _
    // Predicated region
    $region30: #{tpu_custom_call.1} parent=1 // pred_check
      _
    $region31: #{tpu_custom_call.1} parent=1 // pred_check_branch
      %1569 = sbr.rel (0) target = $region33
    $region32: #{tpu_custom_call.1} parent=1 // pred_region
      %1570 = dma.done [#allocation4], 16
    $region33: #{tpu_custom_call.1} parent=1 // pred_fallthru
      _
    %1571 = vsyncpa [#allocation3], 1
    %1572 = vsyncpa [#allocation6], 1
    %1573 = vsyncpa [#allocation4], 1

</llo_original>
